<compile_context>
chip_gen: v5e
topology: v5e:2x2
jax: 0.10.0
libtpu: 0.0.40
codegen_flags: <defaults>
</compile_context>

<pallas_src>
import functools

import jax
import jax.numpy as jnp
from jax.experimental import pallas as pl
from jax.experimental.pallas import tpu as pltpu


def lstm_kernel(x_ref, wih_ref, whh_ref, b_ref, out_ref, hn_ref, cn_ref, *,
                seq_len, batch, hidden):
    S, B, H = seq_len, batch, hidden

    # Hoisted input projection: one (S*B, I) x (I, 4H) MXU call + bias add.
    # Reshape to (S, B, 4H) happens here, off the serial recurrence, so the
    # per-step read is a static leading-axis index (no sublane shifts).
    x_proj = (jnp.dot(x_ref[...], wih_ref[...],
                      preferred_element_type=jnp.float32)
              + b_ref[...])                                   # (S*B, 4H)
    x_proj = x_proj.reshape(S, B, 4 * H)                      # (S, B, 4H)

    whh = whh_ref[...]                                        # (H, 4H)

    h = jnp.zeros((B, H), jnp.float32)
    c = jnp.zeros((B, H), jnp.float32)
    # S is tiny and static -> fully unrolled straight-line serial chain,
    # visible to the LLO scheduler.  Per step: one (B,H)x(H,4H) matmul,
    # one full-width sigmoid, one full-width tanh, cell/output elementwise
    # math, and one off-chain store of h_t.
    for t in range(S):
        gates = x_proj[t] + jnp.dot(h, whh,
                                    preferred_element_type=jnp.float32)  # (B,4H)
        sig = jax.nn.sigmoid(gates)          # full-width EUP launch
        tnh = jnp.tanh(gates)                # full-width EUP launch
        # PyTorch gate block order: [i, f, g, o]
        i_g = sig[:, 0 * H:1 * H]
        f_g = sig[:, 1 * H:2 * H]
        g_g = tnh[:, 2 * H:3 * H]
        o_g = sig[:, 3 * H:4 * H]
        c = f_g * c + i_g * g_g
        h = o_g * jnp.tanh(c)
        # Static leading-axis store; independent of the recurrence chain so it
        # overlaps with the next step's compute.
        out_ref[t] = h.astype(out_ref.dtype)

    hn_ref[0] = h.astype(hn_ref.dtype)
    cn_ref[0] = c.astype(cn_ref.dtype)


def prepare_lstm_params(w_ih, w_hh, b_ih, b_hh):
    """One-time parameter preprocessing (do NOT run per forward call)."""
    wih_t = jnp.asarray(w_ih).T                  # (I, 4H)
    whh_t = jnp.asarray(w_hh).T                  # (H, 4H)
    b = (jnp.asarray(b_ih) + jnp.asarray(b_hh)).reshape(1, -1)  # (1, 4H)
    return wih_t, whh_t, b


@jax.jit
def rnn_readout_wrapper_forward(x, wih_t, whh_t, b):
    """Equivalent of RNNReadoutWrapper.forward(all_inputs) with hidden=None.

    x:      (S, B, I) float32
    wih_t:  (I, 4H), whh_t: (H, 4H), b: (1, 4H)  -- from prepare_lstm_params
    Returns (rnn_out (S,B,H), (h_n (1,B,H), c_n (1,B,H))).
    """
    S, B, I = x.shape
    H4 = wih_t.shape[1]
    H = H4 // 4
    x2d = x.reshape(S * B, I)                    # layout-free wrapper reshape

    cost = pl.CostEstimate(
        flops=2 * S * B * (I + H) * H4,
        transcendentals=S * B * 9 * H,
        bytes_accessed=4 * (S * B * I + I * H4 + H * H4 + H4
                            + S * B * H + 2 * B * H),
    )

    kernel = functools.partial(lstm_kernel, seq_len=S, batch=B, hidden=H)
    # Single invocation, no grid: problem fits in a few tens of KB of VMEM;
    # per-grid-step overhead would dwarf a step's compute.
    # TODO(synk): on v7x a leading "parallel" grid axis over independent
    # sequences would engage the second TensorCore; with a single sequence
    # here it stays grid=().
    rnn_out, h_n, c_n = pl.pallas_call(
        kernel,
        out_shape=(jax.ShapeDtypeStruct((S, B, H), x.dtype),
                   jax.ShapeDtypeStruct((1, B, H), x.dtype),
                   jax.ShapeDtypeStruct((1, B, H), x.dtype)),
        in_specs=[pl.BlockSpec(memory_space=pltpu.MemorySpace.VMEM)] * 4,
        out_specs=(pl.BlockSpec(memory_space=pltpu.MemorySpace.VMEM),
                   pl.BlockSpec(memory_space=pltpu.MemorySpace.VMEM),
                   pl.BlockSpec(memory_space=pltpu.MemorySpace.VMEM)),
        cost_estimate=cost,
    )(x2d, wih_t, whh_t, b)

    return rnn_out, (h_n, c_n)


def lstm_reference(x, w_ih, w_hh, b_ih, b_hh):
    """Pure-JAX reference (mirrors torch.nn.LSTM, single layer, zero init)."""
    S, B, I = x.shape
    H = w_hh.shape[1]

    def step(carry, x_t):
        h, c = carry
        gates = x_t @ w_ih.T + h @ w_hh.T + b_ih + b_hh
        i_g = jax.nn.sigmoid(gates[:, 0 * H:1 * H])
        f_g = jax.nn.sigmoid(gates[:, 1 * H:2 * H])
        g_g = jnp.tanh(gates[:, 2 * H:3 * H])
        o_g = jax.nn.sigmoid(gates[:, 3 * H:4 * H])
        c_new = f_g * c + i_g * g_g
        h_new = o_g * jnp.tanh(c_new)
        return (h_new, c_new), h_new

    (h_n, c_n), ys = jax.lax.scan(
        step, (jnp.zeros((B, H), x.dtype), jnp.zeros((B, H), x.dtype)), x)
    return ys, (h_n[None], c_n[None])


if __name__ == "__main__":
    # Small shapes consistent with the module: seq=8, batch=4, input=16,
    # hidden=32, output_size=8 (readout is defined but unused in forward).
    S, B, I, H, OUT = 8, 4, 16, 32, 8

    key = jax.random.PRNGKey(0)
    kx, k1, k2, k3, k4, k5, k6 = jax.random.split(key, 7)

    x = jax.random.normal(kx, (S, B, I), dtype=jnp.float32)

    # PyTorch LSTM parameter shapes: (4H, I), (4H, H), (4H,)
    scale = 1.0 / jnp.sqrt(H)
    w_ih = jax.random.uniform(k1, (4 * H, I), jnp.float32, -scale, scale)
    w_hh = jax.random.uniform(k2, (4 * H, H), jnp.float32, -scale, scale)
    b_ih = jax.random.uniform(k3, (4 * H,), jnp.float32, -scale, scale)
    b_hh = jax.random.uniform(k4, (4 * H,), jnp.float32, -scale, scale)

    # hidden2out parameters exist in __init__ but forward never applies them.
    w_readout = jax.random.uniform(k5, (OUT, H), jnp.float32, -scale, scale)
    b_readout = jax.random.uniform(k6, (OUT,), jnp.float32, -scale, scale)
    # TODO(synk): readout (hidden2out) is intentionally unused, matching the
    # PyTorch forward ("BUT DOESN'T USE READOUT").

    # One-time parameter preprocessing (cached across forward calls).
    wih_t, whh_t, b = jax.block_until_ready(
        prepare_lstm_params(w_ih, w_hh, b_ih, b_hh))

    rnn_out, (h_n, c_n) = rnn_readout_wrapper_forward(x, wih_t, whh_t, b)
    jax.block_until_ready((rnn_out, h_n, c_n))

    ref_out, (ref_h, ref_c) = lstm_reference(x, w_ih, w_hh, b_ih, b_hh)
    assert rnn_out.shape == (S, B, H)
    assert h_n.shape == (1, B, H) and c_n.shape == (1, B, H)
    assert jnp.allclose(rnn_out, ref_out, atol=1e-5, rtol=1e-5)
    assert jnp.allclose(h_n, ref_h, atol=1e-5, rtol=1e-5)
    assert jnp.allclose(c_n, ref_c, atol=1e-5, rtol=1e-5)

    print("KERNEL_OK")
</pallas_src>

<mosaic_0001>
module attributes {stable_mosaic.version = 11 : i64} {
  func.func @lstm_kernel(%arg0: memref<32x16xf32, #tpu.memory_space<vmem>>, %arg1: memref<16x128xf32, #tpu.memory_space<vmem>>, %arg2: memref<32x128xf32, #tpu.memory_space<vmem>>, %arg3: memref<1x128xf32, #tpu.memory_space<vmem>>, %arg4: memref<8x4x32xf32, #tpu.memory_space<vmem>>, %arg5: memref<1x4x32xf32, #tpu.memory_space<vmem>>, %arg6: memref<1x4x32xf32, #tpu.memory_space<vmem>>) attributes {dimension_semantics = [], scalar_prefetch = 0 : i64, scratch_operands = 0 : i64, tpu.core_type = #tpu.core_type<tc>} {
    %c0 = arith.constant 0 : index
    %c0_0 = arith.constant 0 : index
    %0 = vector.load %arg0[%c0, %c0_0] : memref<32x16xf32, #tpu.memory_space<vmem>>, vector<32x16xf32>
    %c0_1 = arith.constant 0 : index
    %c0_2 = arith.constant 0 : index
    %1 = vector.load %arg1[%c0_1, %c0_2] : memref<16x128xf32, #tpu.memory_space<vmem>>, vector<16x128xf32>
    %cst = arith.constant dense<0.000000e+00> : vector<32x128xf32>
    %2 = tpu.matmul %0, %1, %cst {dimension_numbers = #tpu.dot_dimension_numbers<[1], [0], [0], [1], [0, 0, 1, 1], [], []>} : vector<32x16xf32>, vector<16x128xf32>, vector<32x128xf32> -> vector<32x128xf32>
    %c0_3 = arith.constant 0 : index
    %c0_4 = arith.constant 0 : index
    %3 = vector.load %arg3[%c0_3, %c0_4] : memref<1x128xf32, #tpu.memory_space<vmem>>, vector<1x128xf32>
    %4 = vector.broadcast %3 : vector<1x128xf32> to vector<32x128xf32>
    %5 = arith.addf %2, %4 : vector<32x128xf32>
    %6 = vector.shape_cast %5 : vector<32x128xf32> to vector<8x4x128xf32>
    %c0_5 = arith.constant 0 : index
    %c0_6 = arith.constant 0 : index
    %7 = vector.load %arg2[%c0_5, %c0_6] : memref<32x128xf32, #tpu.memory_space<vmem>>, vector<32x128xf32>
    %cst_7 = arith.constant 0.000000e+00 : f32
    %8 = vector.broadcast %cst_7 : f32 to vector<4x32xf32>
    %cst_8 = arith.constant 0.000000e+00 : f32
    %9 = vector.broadcast %cst_8 : f32 to vector<4x32xf32>
    %10 = vector.extract_strided_slice %6 {offsets = [0, 0, 0], sizes = [1, 4, 128], strides = [1, 1, 1]} : vector<8x4x128xf32> to vector<1x4x128xf32>
    %11 = vector.shape_cast %10 : vector<1x4x128xf32> to vector<4x128xf32>
    %cst_9 = arith.constant dense<0.000000e+00> : vector<4x128xf32>
    %12 = tpu.matmul %8, %7, %cst_9 {dimension_numbers = #tpu.dot_dimension_numbers<[1], [0], [0], [1], [0, 0, 1, 1], [], []>} : vector<4x32xf32>, vector<32x128xf32>, vector<4x128xf32> -> vector<4x128xf32>
    %13 = arith.addf %11, %12 : vector<4x128xf32>
    %14 = arith.negf %13 : vector<4x128xf32>
    %15 = math.exp %14 : vector<4x128xf32>
    %cst_10 = arith.constant 1.000000e+00 : f32
    %16 = vector.broadcast %cst_10 : f32 to vector<4x128xf32>
    %17 = arith.addf %16, %15 : vector<4x128xf32>
    %18 = arith.divf %16, %17 : vector<4x128xf32>
    %19 = math.tanh %13 : vector<4x128xf32>
    %20 = vector.extract_strided_slice %18 {offsets = [0, 0], sizes = [4, 32], strides = [1, 1]} : vector<4x128xf32> to vector<4x32xf32>
    %21 = vector.extract_strided_slice %18 {offsets = [0, 32], sizes = [4, 32], strides = [1, 1]} : vector<4x128xf32> to vector<4x32xf32>
    %22 = vector.extract_strided_slice %19 {offsets = [0, 64], sizes = [4, 32], strides = [1, 1]} : vector<4x128xf32> to vector<4x32xf32>
    %23 = vector.extract_strided_slice %18 {offsets = [0, 96], sizes = [4, 32], strides = [1, 1]} : vector<4x128xf32> to vector<4x32xf32>
    %24 = arith.mulf %21, %9 : vector<4x32xf32>
    %25 = arith.mulf %20, %22 : vector<4x32xf32>
    %26 = arith.addf %24, %25 : vector<4x32xf32>
    %27 = math.tanh %26 : vector<4x32xf32>
    %28 = arith.mulf %23, %27 : vector<4x32xf32>
    %c0_11 = arith.constant 0 : index
    %c0_12 = arith.constant 0 : index
    %c0_13 = arith.constant 0 : index
    %29 = vector.load %arg4[%c0_11, %c0_12, %c0_13] : memref<8x4x32xf32, #tpu.memory_space<vmem>>, vector<1x4x32xf32>
    %30 = vector.shape_cast %29 : vector<1x4x32xf32> to vector<4x32xf32>
    %31 = vector.shape_cast %28 : vector<4x32xf32> to vector<1x4x32xf32>
    tpu.vector_store %arg4[%c0_11, %c0_12, %c0_13], %31 {strides = array<i32>} : memref<8x4x32xf32, #tpu.memory_space<vmem>>, vector<1x4x32xf32>,
    %32 = vector.extract_strided_slice %6 {offsets = [1, 0, 0], sizes = [1, 4, 128], strides = [1, 1, 1]} : vector<8x4x128xf32> to vector<1x4x128xf32>
    %33 = vector.shape_cast %32 : vector<1x4x128xf32> to vector<4x128xf32>
    %cst_14 = arith.constant dense<0.000000e+00> : vector<4x128xf32>
    %34 = tpu.matmul %28, %7, %cst_14 {dimension_numbers = #tpu.dot_dimension_numbers<[1], [0], [0], [1], [0, 0, 1, 1], [], []>} : vector<4x32xf32>, vector<32x128xf32>, vector<4x128xf32> -> vector<4x128xf32>
    %35 = arith.addf %33, %34 : vector<4x128xf32>
    %36 = arith.negf %35 : vector<4x128xf32>
    %37 = math.exp %36 : vector<4x128xf32>
    %cst_15 = arith.constant 1.000000e+00 : f32
    %38 = vector.broadcast %cst_15 : f32 to vector<4x128xf32>
    %39 = arith.addf %38, %37 : vector<4x128xf32>
    %40 = arith.divf %38, %39 : vector<4x128xf32>
    %41 = math.tanh %35 : vector<4x128xf32>
    %42 = vector.extract_strided_slice %40 {offsets = [0, 0], sizes = [4, 32], strides = [1, 1]} : vector<4x128xf32> to vector<4x32xf32>
    %43 = vector.extract_strided_slice %40 {offsets = [0, 32], sizes = [4, 32], strides = [1, 1]} : vector<4x128xf32> to vector<4x32xf32>
    %44 = vector.extract_strided_slice %41 {offsets = [0, 64], sizes = [4, 32], strides = [1, 1]} : vector<4x128xf32> to vector<4x32xf32>
    %45 = vector.extract_strided_slice %40 {offsets = [0, 96], sizes = [4, 32], strides = [1, 1]} : vector<4x128xf32> to vector<4x32xf32>
    %46 = arith.mulf %43, %26 : vector<4x32xf32>
    %47 = arith.mulf %42, %44 : vector<4x32xf32>
    %48 = arith.addf %46, %47 : vector<4x32xf32>
    %49 = math.tanh %48 : vector<4x32xf32>
    %50 = arith.mulf %45, %49 : vector<4x32xf32>
    %c1 = arith.constant 1 : index
    %c0_16 = arith.constant 0 : index
    %c0_17 = arith.constant 0 : index
    %51 = vector.load %arg4[%c1, %c0_16, %c0_17] : memref<8x4x32xf32, #tpu.memory_space<vmem>>, vector<1x4x32xf32>
    %52 = vector.shape_cast %51 : vector<1x4x32xf32> to vector<4x32xf32>
    %53 = vector.shape_cast %50 : vector<4x32xf32> to vector<1x4x32xf32>
    tpu.vector_store %arg4[%c1, %c0_16, %c0_17], %53 {strides = array<i32>} : memref<8x4x32xf32, #tpu.memory_space<vmem>>, vector<1x4x32xf32>,
    %54 = vector.extract_strided_slice %6 {offsets = [2, 0, 0], sizes = [1, 4, 128], strides = [1, 1, 1]} : vector<8x4x128xf32> to vector<1x4x128xf32>
    %55 = vector.shape_cast %54 : vector<1x4x128xf32> to vector<4x128xf32>
    %cst_18 = arith.constant dense<0.000000e+00> : vector<4x128xf32>
    %56 = tpu.matmul %50, %7, %cst_18 {dimension_numbers = #tpu.dot_dimension_numbers<[1], [0], [0], [1], [0, 0, 1, 1], [], []>} : vector<4x32xf32>, vector<32x128xf32>, vector<4x128xf32> -> vector<4x128xf32>
    %57 = arith.addf %55, %56 : vector<4x128xf32>
    %58 = arith.negf %57 : vector<4x128xf32>
    %59 = math.exp %58 : vector<4x128xf32>
    %cst_19 = arith.constant 1.000000e+00 : f32
    %60 = vector.broadcast %cst_19 : f32 to vector<4x128xf32>
    %61 = arith.addf %60, %59 : vector<4x128xf32>
    %62 = arith.divf %60, %61 : vector<4x128xf32>
    %63 = math.tanh %57 : vector<4x128xf32>
    %64 = vector.extract_strided_slice %62 {offsets = [0, 0], sizes = [4, 32], strides = [1, 1]} : vector<4x128xf32> to vector<4x32xf32>
    %65 = vector.extract_strided_slice %62 {offsets = [0, 32], sizes = [4, 32], strides = [1, 1]} : vector<4x128xf32> to vector<4x32xf32>
    %66 = vector.extract_strided_slice %63 {offsets = [0, 64], sizes = [4, 32], strides = [1, 1]} : vector<4x128xf32> to vector<4x32xf32>
    %67 = vector.extract_strided_slice %62 {offsets = [0, 96], sizes = [4, 32], strides = [1, 1]} : vector<4x128xf32> to vector<4x32xf32>
    %68 = arith.mulf %65, %48 : vector<4x32xf32>
    %69 = arith.mulf %64, %66 : vector<4x32xf32>
    %70 = arith.addf %68, %69 : vector<4x32xf32>
    %71 = math.tanh %70 : vector<4x32xf32>
    %72 = arith.mulf %67, %71 : vector<4x32xf32>
    %c2 = arith.constant 2 : index
    %c0_20 = arith.constant 0 : index
    %c0_21 = arith.constant 0 : index
    %73 = vector.load %arg4[%c2, %c0_20, %c0_21] : memref<8x4x32xf32, #tpu.memory_space<vmem>>, vector<1x4x32xf32>
    %74 = vector.shape_cast %73 : vector<1x4x32xf32> to vector<4x32xf32>
    %75 = vector.shape_cast %72 : vector<4x32xf32> to vector<1x4x32xf32>
    tpu.vector_store %arg4[%c2, %c0_20, %c0_21], %75 {strides = array<i32>} : memref<8x4x32xf32, #tpu.memory_space<vmem>>, vector<1x4x32xf32>,
    %76 = vector.extract_strided_slice %6 {offsets = [3, 0, 0], sizes = [1, 4, 128], strides = [1, 1, 1]} : vector<8x4x128xf32> to vector<1x4x128xf32>
    %77 = vector.shape_cast %76 : vector<1x4x128xf32> to vector<4x128xf32>
    %cst_22 = arith.constant dense<0.000000e+00> : vector<4x128xf32>
    %78 = tpu.matmul %72, %7, %cst_22 {dimension_numbers = #tpu.dot_dimension_numbers<[1], [0], [0], [1], [0, 0, 1, 1], [], []>} : vector<4x32xf32>, vector<32x128xf32>, vector<4x128xf32> -> vector<4x128xf32>
    %79 = arith.addf %77, %78 : vector<4x128xf32>
    %80 = arith.negf %79 : vector<4x128xf32>
    %81 = math.exp %80 : vector<4x128xf32>
    %cst_23 = arith.constant 1.000000e+00 : f32
    %82 = vector.broadcast %cst_23 : f32 to vector<4x128xf32>
    %83 = arith.addf %82, %81 : vector<4x128xf32>
    %84 = arith.divf %82, %83 : vector<4x128xf32>
    %85 = math.tanh %79 : vector<4x128xf32>
    %86 = vector.extract_strided_slice %84 {offsets = [0, 0], sizes = [4, 32], strides = [1, 1]} : vector<4x128xf32> to vector<4x32xf32>
    %87 = vector.extract_strided_slice %84 {offsets = [0, 32], sizes = [4, 32], strides = [1, 1]} : vector<4x128xf32> to vector<4x32xf32>
    %88 = vector.extract_strided_slice %85 {offsets = [0, 64], sizes = [4, 32], strides = [1, 1]} : vector<4x128xf32> to vector<4x32xf32>
    %89 = vector.extract_strided_slice %84 {offsets = [0, 96], sizes = [4, 32], strides = [1, 1]} : vector<4x128xf32> to vector<4x32xf32>
    %90 = arith.mulf %87, %70 : vector<4x32xf32>
    %91 = arith.mulf %86, %88 : vector<4x32xf32>
    %92 = arith.addf %90, %91 : vector<4x32xf32>
    %93 = math.tanh %92 : vector<4x32xf32>
    %94 = arith.mulf %89, %93 : vector<4x32xf32>
    %c3 = arith.constant 3 : index
    %c0_24 = arith.constant 0 : index
    %c0_25 = arith.constant 0 : index
    %95 = vector.load %arg4[%c3, %c0_24, %c0_25] : memref<8x4x32xf32, #tpu.memory_space<vmem>>, vector<1x4x32xf32>
    %96 = vector.shape_cast %95 : vector<1x4x32xf32> to vector<4x32xf32>
    %97 = vector.shape_cast %94 : vector<4x32xf32> to vector<1x4x32xf32>
    tpu.vector_store %arg4[%c3, %c0_24, %c0_25], %97 {strides = array<i32>} : memref<8x4x32xf32, #tpu.memory_space<vmem>>, vector<1x4x32xf32>,
    %98 = vector.extract_strided_slice %6 {offsets = [4, 0, 0], sizes = [1, 4, 128], strides = [1, 1, 1]} : vector<8x4x128xf32> to vector<1x4x128xf32>
    %99 = vector.shape_cast %98 : vector<1x4x128xf32> to vector<4x128xf32>
    %cst_26 = arith.constant dense<0.000000e+00> : vector<4x128xf32>
    %100 = tpu.matmul %94, %7, %cst_26 {dimension_numbers = #tpu.dot_dimension_numbers<[1], [0], [0], [1], [0, 0, 1, 1], [], []>} : vector<4x32xf32>, vector<32x128xf32>, vector<4x128xf32> -> vector<4x128xf32>
    %101 = arith.addf %99, %100 : vector<4x128xf32>
    %102 = arith.negf %101 : vector<4x128xf32>
    %103 = math.exp %102 : vector<4x128xf32>
    %cst_27 = arith.constant 1.000000e+00 : f32
    %104 = vector.broadcast %cst_27 : f32 to vector<4x128xf32>
    %105 = arith.addf %104, %103 : vector<4x128xf32>
    %106 = arith.divf %104, %105 : vector<4x128xf32>
    %107 = math.tanh %101 : vector<4x128xf32>
    %108 = vector.extract_strided_slice %106 {offsets = [0, 0], sizes = [4, 32], strides = [1, 1]} : vector<4x128xf32> to vector<4x32xf32>
    %109 = vector.extract_strided_slice %106 {offsets = [0, 32], sizes = [4, 32], strides = [1, 1]} : vector<4x128xf32> to vector<4x32xf32>
    %110 = vector.extract_strided_slice %107 {offsets = [0, 64], sizes = [4, 32], strides = [1, 1]} : vector<4x128xf32> to vector<4x32xf32>
    %111 = vector.extract_strided_slice %106 {offsets = [0, 96], sizes = [4, 32], strides = [1, 1]} : vector<4x128xf32> to vector<4x32xf32>
    %112 = arith.mulf %109, %92 : vector<4x32xf32>
    %113 = arith.mulf %108, %110 : vector<4x32xf32>
    %114 = arith.addf %112, %113 : vector<4x32xf32>
    %115 = math.tanh %114 : vector<4x32xf32>
    %116 = arith.mulf %111, %115 : vector<4x32xf32>
    %c4 = arith.constant 4 : index
    %c0_28 = arith.constant 0 : index
    %c0_29 = arith.constant 0 : index
    %117 = vector.load %arg4[%c4, %c0_28, %c0_29] : memref<8x4x32xf32, #tpu.memory_space<vmem>>, vector<1x4x32xf32>
    %118 = vector.shape_cast %117 : vector<1x4x32xf32> to vector<4x32xf32>
    %119 = vector.shape_cast %116 : vector<4x32xf32> to vector<1x4x32xf32>
    tpu.vector_store %arg4[%c4, %c0_28, %c0_29], %119 {strides = array<i32>} : memref<8x4x32xf32, #tpu.memory_space<vmem>>, vector<1x4x32xf32>,
    %120 = vector.extract_strided_slice %6 {offsets = [5, 0, 0], sizes = [1, 4, 128], strides = [1, 1, 1]} : vector<8x4x128xf32> to vector<1x4x128xf32>
    %121 = vector.shape_cast %120 : vector<1x4x128xf32> to vector<4x128xf32>
    %cst_30 = arith.constant dense<0.000000e+00> : vector<4x128xf32>
    %122 = tpu.matmul %116, %7, %cst_30 {dimension_numbers = #tpu.dot_dimension_numbers<[1], [0], [0], [1], [0, 0, 1, 1], [], []>} : vector<4x32xf32>, vector<32x128xf32>, vector<4x128xf32> -> vector<4x128xf32>
    %123 = arith.addf %121, %122 : vector<4x128xf32>
    %124 = arith.negf %123 : vector<4x128xf32>
    %125 = math.exp %124 : vector<4x128xf32>
    %cst_31 = arith.constant 1.000000e+00 : f32
    %126 = vector.broadcast %cst_31 : f32 to vector<4x128xf32>
    %127 = arith.addf %126, %125 : vector<4x128xf32>
    %128 = arith.divf %126, %127 : vector<4x128xf32>
    %129 = math.tanh %123 : vector<4x128xf32>
    %130 = vector.extract_strided_slice %128 {offsets = [0, 0], sizes = [4, 32], strides = [1, 1]} : vector<4x128xf32> to vector<4x32xf32>
    %131 = vector.extract_strided_slice %128 {offsets = [0, 32], sizes = [4, 32], strides = [1, 1]} : vector<4x128xf32> to vector<4x32xf32>
    %132 = vector.extract_strided_slice %129 {offsets = [0, 64], sizes = [4, 32], strides = [1, 1]} : vector<4x128xf32> to vector<4x32xf32>
    %133 = vector.extract_strided_slice %128 {offsets = [0, 96], sizes = [4, 32], strides = [1, 1]} : vector<4x128xf32> to vector<4x32xf32>
    %134 = arith.mulf %131, %114 : vector<4x32xf32>
    %135 = arith.mulf %130, %132 : vector<4x32xf32>
    %136 = arith.addf %134, %135 : vector<4x32xf32>
    %137 = math.tanh %136 : vector<4x32xf32>
    %138 = arith.mulf %133, %137 : vector<4x32xf32>
    %c5 = arith.constant 5 : index
    %c0_32 = arith.constant 0 : index
    %c0_33 = arith.constant 0 : index
    %139 = vector.load %arg4[%c5, %c0_32, %c0_33] : memref<8x4x32xf32, #tpu.memory_space<vmem>>, vector<1x4x32xf32>
    %140 = vector.shape_cast %139 : vector<1x4x32xf32> to vector<4x32xf32>
    %141 = vector.shape_cast %138 : vector<4x32xf32> to vector<1x4x32xf32>
    tpu.vector_store %arg4[%c5, %c0_32, %c0_33], %141 {strides = array<i32>} : memref<8x4x32xf32, #tpu.memory_space<vmem>>, vector<1x4x32xf32>,
    %142 = vector.extract_strided_slice %6 {offsets = [6, 0, 0], sizes = [1, 4, 128], strides = [1, 1, 1]} : vector<8x4x128xf32> to vector<1x4x128xf32>
    %143 = vector.shape_cast %142 : vector<1x4x128xf32> to vector<4x128xf32>
    %cst_34 = arith.constant dense<0.000000e+00> : vector<4x128xf32>
    %144 = tpu.matmul %138, %7, %cst_34 {dimension_numbers = #tpu.dot_dimension_numbers<[1], [0], [0], [1], [0, 0, 1, 1], [], []>} : vector<4x32xf32>, vector<32x128xf32>, vector<4x128xf32> -> vector<4x128xf32>
    %145 = arith.addf %143, %144 : vector<4x128xf32>
    %146 = arith.negf %145 : vector<4x128xf32>
    %147 = math.exp %146 : vector<4x128xf32>
    %cst_35 = arith.constant 1.000000e+00 : f32
    %148 = vector.broadcast %cst_35 : f32 to vector<4x128xf32>
    %149 = arith.addf %148, %147 : vector<4x128xf32>
    %150 = arith.divf %148, %149 : vector<4x128xf32>
    %151 = math.tanh %145 : vector<4x128xf32>
    %152 = vector.extract_strided_slice %150 {offsets = [0, 0], sizes = [4, 32], strides = [1, 1]} : vector<4x128xf32> to vector<4x32xf32>
    %153 = vector.extract_strided_slice %150 {offsets = [0, 32], sizes = [4, 32], strides = [1, 1]} : vector<4x128xf32> to vector<4x32xf32>
    %154 = vector.extract_strided_slice %151 {offsets = [0, 64], sizes = [4, 32], strides = [1, 1]} : vector<4x128xf32> to vector<4x32xf32>
    %155 = vector.extract_strided_slice %150 {offsets = [0, 96], sizes = [4, 32], strides = [1, 1]} : vector<4x128xf32> to vector<4x32xf32>
    %156 = arith.mulf %153, %136 : vector<4x32xf32>
    %157 = arith.mulf %152, %154 : vector<4x32xf32>
    %158 = arith.addf %156, %157 : vector<4x32xf32>
    %159 = math.tanh %158 : vector<4x32xf32>
    %160 = arith.mulf %155, %159 : vector<4x32xf32>
    %c6 = arith.constant 6 : index
    %c0_36 = arith.constant 0 : index
    %c0_37 = arith.constant 0 : index
    %161 = vector.load %arg4[%c6, %c0_36, %c0_37] : memref<8x4x32xf32, #tpu.memory_space<vmem>>, vector<1x4x32xf32>
    %162 = vector.shape_cast %161 : vector<1x4x32xf32> to vector<4x32xf32>
    %163 = vector.shape_cast %160 : vector<4x32xf32> to vector<1x4x32xf32>
    tpu.vector_store %arg4[%c6, %c0_36, %c0_37], %163 {strides = array<i32>} : memref<8x4x32xf32, #tpu.memory_space<vmem>>, vector<1x4x32xf32>,
    %164 = vector.extract_strided_slice %6 {offsets = [7, 0, 0], sizes = [1, 4, 128], strides = [1, 1, 1]} : vector<8x4x128xf32> to vector<1x4x128xf32>
    %165 = vector.shape_cast %164 : vector<1x4x128xf32> to vector<4x128xf32>
    %cst_38 = arith.constant dense<0.000000e+00> : vector<4x128xf32>
    %166 = tpu.matmul %160, %7, %cst_38 {dimension_numbers = #tpu.dot_dimension_numbers<[1], [0], [0], [1], [0, 0, 1, 1], [], []>} : vector<4x32xf32>, vector<32x128xf32>, vector<4x128xf32> -> vector<4x128xf32>
    %167 = arith.addf %165, %166 : vector<4x128xf32>
    %168 = arith.negf %167 : vector<4x128xf32>
    %169 = math.exp %168 : vector<4x128xf32>
    %cst_39 = arith.constant 1.000000e+00 : f32
    %170 = vector.broadcast %cst_39 : f32 to vector<4x128xf32>
    %171 = arith.addf %170, %169 : vector<4x128xf32>
    %172 = arith.divf %170, %171 : vector<4x128xf32>
    %173 = math.tanh %167 : vector<4x128xf32>
    %174 = vector.extract_strided_slice %172 {offsets = [0, 0], sizes = [4, 32], strides = [1, 1]} : vector<4x128xf32> to vector<4x32xf32>
    %175 = vector.extract_strided_slice %172 {offsets = [0, 32], sizes = [4, 32], strides = [1, 1]} : vector<4x128xf32> to vector<4x32xf32>
    %176 = vector.extract_strided_slice %173 {offsets = [0, 64], sizes = [4, 32], strides = [1, 1]} : vector<4x128xf32> to vector<4x32xf32>
    %177 = vector.extract_strided_slice %172 {offsets = [0, 96], sizes = [4, 32], strides = [1, 1]} : vector<4x128xf32> to vector<4x32xf32>
    %178 = arith.mulf %175, %158 : vector<4x32xf32>
    %179 = arith.mulf %174, %176 : vector<4x32xf32>
    %180 = arith.addf %178, %179 : vector<4x32xf32>
    %181 = math.tanh %180 : vector<4x32xf32>
    %182 = arith.mulf %177, %181 : vector<4x32xf32>
    %c7 = arith.constant 7 : index
    %c0_40 = arith.constant 0 : index
    %c0_41 = arith.constant 0 : index
    %183 = vector.load %arg4[%c7, %c0_40, %c0_41] : memref<8x4x32xf32, #tpu.memory_space<vmem>>, vector<1x4x32xf32>
    %184 = vector.shape_cast %183 : vector<1x4x32xf32> to vector<4x32xf32>
    %185 = vector.shape_cast %182 : vector<4x32xf32> to vector<1x4x32xf32>
    tpu.vector_store %arg4[%c7, %c0_40, %c0_41], %185 {strides = array<i32>} : memref<8x4x32xf32, #tpu.memory_space<vmem>>, vector<1x4x32xf32>,
    %c0_42 = arith.constant 0 : index
    %c0_43 = arith.constant 0 : index
    %c0_44 = arith.constant 0 : index
    %186 = vector.load %arg5[%c0_42, %c0_43, %c0_44] : memref<1x4x32xf32, #tpu.memory_space<vmem>>, vector<1x4x32xf32>
    %187 = vector.shape_cast %186 : vector<1x4x32xf32> to vector<4x32xf32>
    %188 = vector.shape_cast %182 : vector<4x32xf32> to vector<1x4x32xf32>
    tpu.vector_store %arg5[%c0_42, %c0_43, %c0_44], %188 {strides = array<i32>} : memref<1x4x32xf32, #tpu.memory_space<vmem>>, vector<1x4x32xf32>,
    %c0_45 = arith.constant 0 : index
    %c0_46 = arith.constant 0 : index
    %c0_47 = arith.constant 0 : index
    %189 = vector.load %arg6[%c0_45, %c0_46, %c0_47] : memref<1x4x32xf32, #tpu.memory_space<vmem>>, vector<1x4x32xf32>
    %190 = vector.shape_cast %189 : vector<1x4x32xf32> to vector<4x32xf32>
    %191 = vector.shape_cast %180 : vector<4x32xf32> to vector<1x4x32xf32>
    tpu.vector_store %arg6[%c0_45, %c0_46, %c0_47], %191 {strides = array<i32>} : memref<1x4x32xf32, #tpu.memory_space<vmem>>, vector<1x4x32xf32>,
    return
  }
}

</mosaic_0001>

<llo_original>
// kernel: rnn_readout_wrapper_forward.1
$region0: #{rnn_readout_wrapper_forward.1}
  #allocation0 [shape = 'u32[]', space=smem, size = 0x4, offset = 0x4, fixed_abs, tag = 'smem constant byte address 0x4 - core index']
  #allocation1 [shape = 'u32[72,128]{1,0:T(1,128)}', space=vmem, size = 0x9000, scoped, tag = 'internal scratch']
  %s0 = inlined_call_operand.hbm [shape: f32[32,16], index: 0, kind: input, shape index: {}]
  %s1 = inlined_call_operand.hbm [shape: f32[16,128], index: 1, kind: input, shape index: {}]
  %s2 = inlined_call_operand.hbm [shape: f32[32,128], index: 2, kind: input, shape index: {}]
  %s3 = inlined_call_operand.vmem [shape: f32[1,128], index: 3, kind: input, shape index: {}]
  %s4 = inlined_call_operand.hbm [shape: f32[8,4,32], index: 4, kind: output, shape index: {0}]
  %s5 = inlined_call_operand.hbm [shape: f32[1,4,32], index: 5, kind: output, shape index: {1}]
  %s6 = inlined_call_operand.hbm [shape: f32[1,4,32], index: 6, kind: output, shape index: {2}]
  %7 = xla_tuple %s4, %s5, %s6
  %s8 = sld [smem:[#allocation0]]
  $region54: #{rnn_readout_wrapper_forward.1} parent=0
    _
  %s10 = ssub.s32 1, %s8
  %s11 = scalar_select 0, %s10, %s8
  $region1: #{rnn_readout_wrapper_forward.1} parent=0
    #allocation2 [shape = 'u8[16384]{0}', space=vmem, size = 0x4000, scoped, tag = 'input window, operand 0, single buffered']
    #allocation3 [shape = 's32[1]{0}', space=sflag, size = 0x4, scoped, tag = 'scoped memory for rnn_readout_wrapper_forward.1']
    #allocation4 [shape = 's32[1]{0}', space=sflag, size = 0x4, scoped, tag = 'scoped memory for rnn_readout_wrapper_forward.1']
    #allocation5 [shape = 'u8[8192]{0}', space=vmem, size = 0x2000, scoped, tag = 'input window, operand 1, single buffered']
    #allocation6 [shape = 's32[1]{0}', space=sflag, size = 0x4, scoped, tag = 'scoped memory for rnn_readout_wrapper_forward.1']
    #allocation7 [shape = 'u8[16384]{0}', space=vmem, size = 0x4000, scoped, tag = 'input window, operand 2, single buffered']
    #allocation8 [shape = 'u8[16384]{0}', space=vmem, size = 0x4000, scoped, tag = 'output window, operand 0, single buffered']
    #allocation9 [shape = 'u8[2048]{0}', space=vmem, size = 0x800, scoped, tag = 'output window, operand 1, single buffered']
    #allocation10 [shape = 's32[1]{0}', space=sflag, size = 0x4, scoped, tag = 'scoped memory for rnn_readout_wrapper_forward.1']
    #allocation11 [shape = 'u8[2048]{0}', space=vmem, size = 0x800, scoped, tag = 'output window, operand 2, single buffered']
    %12 = vsyncpa [#allocation3], 0
    %13 = vsyncpa [#allocation6], 0
    %14 = vsyncpa [#allocation4], 0
    %15 = vsyncpa [#allocation10], 0
    // Predicated region
    $region2: #{rnn_readout_wrapper_forward.1} parent=1 // pred_check
      _
    $region3: #{rnn_readout_wrapper_forward.1} parent=1 // pred_check_branch
      %17 = sbr.rel (0) target = $region5
    $region4: #{rnn_readout_wrapper_forward.1} parent=1 // pred_region
      %19 = vsyncadd [#allocation3], 0
      %s20 = sshll.u32 %s0, 4
      %s21 = int_to_ptr.hbm [resolvable:$true] %s20
      %s22 = sshll.u32 [#allocation2], 4
      %s23 = int_to_ptr.vmem [resolvable:$true] %s22
      %28 = dma.hbm_to_vmem [thread:$0]  %s21, 512, %s23, [#allocation3], 128, 128, 8
    $region5: #{rnn_readout_wrapper_forward.1} parent=1 // pred_fallthru
      _
    // Predicated region
    $region6: #{rnn_readout_wrapper_forward.1} parent=1 // pred_check
      _
    $region7: #{rnn_readout_wrapper_forward.1} parent=1 // pred_check_branch
      %30 = sbr.rel (0) target = $region9
    $region8: #{rnn_readout_wrapper_forward.1} parent=1 // pred_region
      %32 = vsyncadd [#allocation6], 0
      %s33 = sshll.u32 %s1, 4
      %s34 = int_to_ptr.hbm [resolvable:$true] %s33
      %s35 = sshll.u32 [#allocation5], 4
      %s36 = int_to_ptr.vmem [resolvable:$true] %s35
      %41 = dma.hbm_to_vmem [thread:$0]  %s34, 256, %s36, [#allocation6], 128, 128, 8
    $region9: #{rnn_readout_wrapper_forward.1} parent=1 // pred_fallthru
      _
    // Predicated region
    $region10: #{rnn_readout_wrapper_forward.1} parent=1 // pred_check
      _
    $region11: #{rnn_readout_wrapper_forward.1} parent=1 // pred_check_branch
      %43 = sbr.rel (0) target = $region13
    $region12: #{rnn_readout_wrapper_forward.1} parent=1 // pred_region
      %45 = vsyncadd [#allocation6], 0
      %s46 = sshll.u32 %s2, 4
      %s47 = int_to_ptr.hbm [resolvable:$true] %s46
      %s48 = sshll.u32 [#allocation7], 4
      %s49 = int_to_ptr.vmem [resolvable:$true] %s48
      %54 = dma.hbm_to_vmem [thread:$0]  %s47, 512, %s49, [#allocation6], 128, 128, 8
    $region13: #{rnn_readout_wrapper_forward.1} parent=1 // pred_fallthru
      _
    // Predicated region
    $region14: #{rnn_readout_wrapper_forward.1} parent=1 // pred_check
      _
    $region15: #{rnn_readout_wrapper_forward.1} parent=1 // pred_check_branch
      %56 = sbr.rel (0) target = $region17
    $region16: #{rnn_readout_wrapper_forward.1} parent=1 // pred_region
      _
    $region17: #{rnn_readout_wrapper_forward.1} parent=1 // pred_fallthru
      _
    // Predicated region
    $region18: #{rnn_readout_wrapper_forward.1} parent=1 // pred_check
      _
    $region19: #{rnn_readout_wrapper_forward.1} parent=1 // pred_check_branch
      %58 = sbr.rel (0) target = $region21
    $region20: #{rnn_readout_wrapper_forward.1} parent=1 // pred_region
      %60 = dma.done [#allocation3], 512
    $region21: #{rnn_readout_wrapper_forward.1} parent=1 // pred_fallthru
      _
    // Predicated region
    $region22: #{rnn_readout_wrapper_forward.1} parent=1 // pred_check
      _
    $region23: #{rnn_readout_wrapper_forward.1} parent=1 // pred_check_branch
      %62 = sbr.rel (0) target = $region25
    $region24: #{rnn_readout_wrapper_forward.1} parent=1 // pred_region
      %64 = dma.done [#allocation6], 256
    $region25: #{rnn_readout_wrapper_forward.1} parent=1 // pred_fallthru
      _
    // Predicated region
    $region26: #{rnn_readout_wrapper_forward.1} parent=1 // pred_check
      _
    $region27: #{rnn_readout_wrapper_forward.1} parent=1 // pred_check_branch
      %66 = sbr.rel (0) target = $region29
    $region28: #{rnn_readout_wrapper_forward.1} parent=1 // pred_region
      %68 = dma.done [#allocation6], 512
    $region29: #{rnn_readout_wrapper_forward.1} parent=1 // pred_fallthru
      _
    %v69 = vld [vmem:[#allocation2] sm:$0xff]
    %v70 = vld [vmem:[#allocation2 + $0x8] sm:$0xff]
    %v71 = vld [vmem:[#allocation2 + $0x10] sm:$0xff]
    %v72 = vld [vmem:[#allocation2 + $0x18] sm:$0xff]
    %v73 = vld [vmem:[#allocation5] sm:$0xff]
    %v74 = vld [vmem:[#allocation5 + $0x8] sm:$0xff]
    %v75 = vld [vmem:[%s3] sm:$0x1]
    %v77 = vperm.slane %v75, 0
    %vm79 = vcmask 130048
    %v81 = vsel %vm79, %v69, 0
    %v84 = vsel %vm79, %v70, 0
    %v87 = vsel %vm79, %v71, 0
    %v90 = vsel %vm79, %v72, 0
    %92 = vmatpush.msra.mxu0 0.0
    %93 = vmatpush.msra.mxu0 0.0
    %94 = vmatpush.msra.mxu0 0.0
    %95 = vmatpush.msra.mxu0 0.0
    %96 = vmatpush.msra.mxu0 0.0
    %97 = vmatpush.msra.mxu0 0.0
    %98 = vmatpush.msra.mxu0 0.0
    %99 = vmatpush.msra.mxu0 0.0
    %100 = vmatpush.msra.mxu0 0.0
    %101 = vmatpush.msra.mxu0 0.0
    %102 = vmatpush.msra.mxu0 0.0
    %103 = vmatpush.msra.mxu0 0.0
    %104 = vmatpush.msra.mxu0 0.0
    %105 = vmatpush.msra.mxu0 0.0
    %106 = vmatpush.msra.mxu0 %v74
    %107 = vmatpush.msra.mxu0 %v73
    %108 = vmatmul.f32.gmra.mxu0 %v81
    %v109 = vpop.f32.mrf.mxu0
    %v110 = vadd.f32 %v77, %v109
    %111 = vmatmul.f32.gmra.mxu0 %v84
    %v112 = vpop.f32.mrf.mxu0
    %v113 = vadd.f32 %v77, %v112
    %114 = vmatmul.f32.gmra.mxu0 %v87
    %v115 = vpop.f32.mrf.mxu0
    %v116 = vadd.f32 %v77, %v115
    %117 = vmatmul.f32.gmra.mxu0 %v90
    %v118 = vpop.f32.mrf.mxu0
    %v119 = vadd.f32 %v77, %v118
    %120 = vdwg.mxu0
    %v125 = vrot.slane %v110, 4
    %v126 = vrot.slane %v113, 4
    %v127 = vrot.slane %v116, 4
    %v128 = vrot.slane %v119, 4
    %v133 = vld [vmem:[#allocation7] sm:$0xff]
    %v134 = vld [vmem:[#allocation7 + $0x8] sm:$0xff]
    %v135 = vld [vmem:[#allocation7 + $0x10] sm:$0xff]
    %v136 = vld [vmem:[#allocation7 + $0x18] sm:$0xff]
    %vm137 = vcmask 261120
    %v139 = vsel %vm137, 0.0, 0
    %141 = vmatpush.msra.mxu0 0.0
    %142 = vmatpush.msra.mxu0 0.0
    %143 = vmatpush.msra.mxu0 0.0
    %144 = vmatpush.msra.mxu0 0.0
    %145 = vmatpush.msra.mxu0 0.0
    %146 = vmatpush.msra.mxu0 0.0
    %147 = vmatpush.msra.mxu0 0.0
    %148 = vmatpush.msra.mxu0 0.0
    %149 = vmatpush.msra.mxu0 0.0
    %150 = vmatpush.msra.mxu0 0.0
    %151 = vmatpush.msra.mxu0 0.0
    %152 = vmatpush.msra.mxu0 0.0
    %153 = vmatpush.msra.mxu0 %v136
    %154 = vmatpush.msra.mxu0 %v135
    %155 = vmatpush.msra.mxu0 %v134
    %156 = vmatpush.msra.mxu0 %v133
    %157 = vmatmul.f32.gmra.mxu0 %v139
    %v158 = vpop.f32.mrf.mxu0
    %v159 = vadd.f32 0.0, %v158
    %160 = vdwg.mxu0
    %v161 = vadd.f32 %v110, %v159
    %v162 = vxor.u32 %v161, 2147483648
    %v163 = vmul.f32 %v162, 1.442695
    %v164 = vpow.pop %v163
    %v165 = vadd.f32 %v164, 1.0
    %v166 = vrcp.pop %v165
    %v167 = vmul.f32 %v165, %v166
    %v168 = vsub.f32 1.0, %v167
    %v169 = vmul.f32 %v166, %v168
    %v170 = vadd.f32 %v166, %v169
    %vm171 = vweird.f32 %v165
    %vm172 = vweird.f32 %v166
    %vm173 = vmor %vm171, %vm172
    %v174 = vsel %vm173, %v166, %v170
    %v175 = vand.u32 2147483647, %v165
    %vm176 = vcmp.eq.f32.partialorder %v175, 8.507059e+37
    %v177 = vand.u32 %v165, 2147483648
    %v178 = vor.u32 1.1754944e-38, %v177
    %v179 = vsel %vm176, %v178, %v174
    %v180 = vmul.f32 1.0, %v179
    %v181 = vtanh.pop %v161
    %v182 = vmul.f32 %v180, 0.0
    %184 = vrot.lane.b32.xlu0 %v181, 64
    %v185 = vpop.permute.xlu0 %184
    %v187 = vmul.f32 %v180, %v185
    %189 = vrot.lane.b32.xlu0 %v187, 32
    %v190 = vpop.permute.xlu0 %189
    %v192 = vadd.f32 %v182, %v190
    %v193 = vtanh.pop %v192
    %195 = vrot.lane.b32.xlu0 %v193, 64
    %v196 = vpop.permute.xlu0 %195
    %v198 = vmul.f32 %v180, %v196
    %200 = vst [vmem:[#allocation1] ss:$2 sm:$0xff] %v198
    %v201 = vld.sshfl [vmem:[#allocation1] sm:$0xff pattern:$0x75316420]
    %202 = vrot.lane.b32.xlu0 %v201, 32
    %v203 = vpop.permute.xlu0 %202
    %vm205 = vcmask 257024
    %206 = vst.msk [vmem:[#allocation8] sm:$0xf] %vm205, %v203
    %207 = vst [vmem:[#allocation1] ss:$2 sm:$0xff] %v198
    %v208 = vld.sshfl [vmem:[#allocation1] sm:$0xff pattern:$0x75316420]
    %209 = vrot.lane.b32.xlu0 %v208, 32
    %v210 = vpop.permute.xlu0 %209
    %v211 = vsel %vm137, %v210, 0
    %213 = vmatpush.msra.mxu0 0.0
    %214 = vmatpush.msra.mxu0 0.0
    %215 = vmatpush.msra.mxu0 0.0
    %216 = vmatpush.msra.mxu0 0.0
    %217 = vmatpush.msra.mxu0 0.0
    %218 = vmatpush.msra.mxu0 0.0
    %219 = vmatpush.msra.mxu0 0.0
    %220 = vmatpush.msra.mxu0 0.0
    %221 = vmatpush.msra.mxu0 0.0
    %222 = vmatpush.msra.mxu0 0.0
    %223 = vmatpush.msra.mxu0 0.0
    %224 = vmatpush.msra.mxu0 0.0
    %225 = vmatpush.msra.mxu0 %v136
    %226 = vmatpush.msra.mxu0 %v135
    %227 = vmatpush.msra.mxu0 %v134
    %228 = vmatpush.msra.mxu0 %v133
    %229 = vmatmul.f32.gmra.mxu0 %v211
    %v230 = vpop.f32.mrf.mxu0
    %v231 = vadd.f32 0.0, %v230
    %232 = vdwg.mxu0
    %v233 = vadd.f32 %v125, %v231
    %v234 = vxor.u32 %v233, 2147483648
    %v235 = vmul.f32 %v234, 1.442695
    %v236 = vpow.pop %v235
    %v237 = vadd.f32 %v236, 1.0
    %v238 = vrcp.pop %v237
    %v239 = vmul.f32 %v237, %v238
    %v240 = vsub.f32 1.0, %v239
    %v241 = vmul.f32 %v238, %v240
    %v242 = vadd.f32 %v238, %v241
    %vm243 = vweird.f32 %v237
    %vm244 = vweird.f32 %v238
    %vm245 = vmor %vm243, %vm244
    %v246 = vsel %vm245, %v238, %v242
    %v247 = vand.u32 2147483647, %v237
    %vm248 = vcmp.eq.f32.partialorder %v247, 8.507059e+37
    %v249 = vand.u32 %v237, 2147483648
    %v250 = vor.u32 1.1754944e-38, %v249
    %v251 = vsel %vm248, %v250, %v246
    %v252 = vmul.f32 1.0, %v251
    %v253 = vtanh.pop %v233
    %v254 = vmul.f32 %v252, %v192
    %256 = vrot.lane.b32.xlu0 %v253, 64
    %v257 = vpop.permute.xlu0 %256
    %v259 = vmul.f32 %v252, %v257
    %261 = vrot.lane.b32.xlu0 %v259, 32
    %v262 = vpop.permute.xlu0 %261
    %v264 = vadd.f32 %v254, %v262
    %v265 = vtanh.pop %v264
    %267 = vrot.lane.b32.xlu0 %v265, 64
    %v268 = vpop.permute.xlu0 %267
    %v270 = vmul.f32 %v252, %v268
    %272 = vst [vmem:[#allocation1] ss:$2 sm:$0xff] %v270
    %v273 = vld.sshfl [vmem:[#allocation1] sm:$0xff pattern:$0x75316420]
    %274 = vrot.lane.b32.xlu0 %v273, 32
    %v275 = vpop.permute.xlu0 %274
    %s277 = scalar_lea.vmem [#allocation8], 4
    %278 = vst.msk [vmem:[%s277] sm:$0xf] %vm205, %v275
    %279 = vst [vmem:[#allocation1] ss:$2 sm:$0xff] %v270
    %v280 = vld.sshfl [vmem:[#allocation1] sm:$0xff pattern:$0x75316420]
    %281 = vrot.lane.b32.xlu0 %v280, 32
    %v282 = vpop.permute.xlu0 %281
    %v283 = vsel %vm137, %v282, 0
    %285 = vmatpush.msra.mxu0 0.0
    %286 = vmatpush.msra.mxu0 0.0
    %287 = vmatpush.msra.mxu0 0.0
    %288 = vmatpush.msra.mxu0 0.0
    %289 = vmatpush.msra.mxu0 0.0
    %290 = vmatpush.msra.mxu0 0.0
    %291 = vmatpush.msra.mxu0 0.0
    %292 = vmatpush.msra.mxu0 0.0
    %293 = vmatpush.msra.mxu0 0.0
    %294 = vmatpush.msra.mxu0 0.0
    %295 = vmatpush.msra.mxu0 0.0
    %296 = vmatpush.msra.mxu0 0.0
    %297 = vmatpush.msra.mxu0 %v136
    %298 = vmatpush.msra.mxu0 %v135
    %299 = vmatpush.msra.mxu0 %v134
    %300 = vmatpush.msra.mxu0 %v133
    %301 = vmatmul.f32.gmra.mxu0 %v283
    %v302 = vpop.f32.mrf.mxu0
    %v303 = vadd.f32 0.0, %v302
    %304 = vdwg.mxu0
    %v305 = vadd.f32 %v113, %v303
    %v306 = vxor.u32 %v305, 2147483648
    %v307 = vmul.f32 %v306, 1.442695
    %v308 = vpow.pop %v307
    %v309 = vadd.f32 %v308, 1.0
    %v310 = vrcp.pop %v309
    %v311 = vmul.f32 %v309, %v310
    %v312 = vsub.f32 1.0, %v311
    %v313 = vmul.f32 %v310, %v312
    %v314 = vadd.f32 %v310, %v313
    %vm315 = vweird.f32 %v309
    %vm316 = vweird.f32 %v310
    %vm317 = vmor %vm315, %vm316
    %v318 = vsel %vm317, %v310, %v314
    %v319 = vand.u32 2147483647, %v309
    %vm320 = vcmp.eq.f32.partialorder %v319, 8.507059e+37
    %v321 = vand.u32 %v309, 2147483648
    %v322 = vor.u32 1.1754944e-38, %v321
    %v323 = vsel %vm320, %v322, %v318
    %v324 = vmul.f32 1.0, %v323
    %v325 = vtanh.pop %v305
    %v326 = vmul.f32 %v324, %v264
    %328 = vrot.lane.b32.xlu0 %v325, 64
    %v329 = vpop.permute.xlu0 %328
    %v331 = vmul.f32 %v324, %v329
    %333 = vrot.lane.b32.xlu0 %v331, 32
    %v334 = vpop.permute.xlu0 %333
    %v336 = vadd.f32 %v326, %v334
    %v337 = vtanh.pop %v336
    %339 = vrot.lane.b32.xlu0 %v337, 64
    %v340 = vpop.permute.xlu0 %339
    %v342 = vmul.f32 %v324, %v340
    %344 = vst [vmem:[#allocation1] ss:$2 sm:$0xff] %v342
    %v345 = vld.sshfl [vmem:[#allocation1] sm:$0xff pattern:$0x75316420]
    %346 = vrot.lane.b32.xlu0 %v345, 32
    %v347 = vpop.permute.xlu0 %346
    %s349 = scalar_lea.vmem [#allocation8], 8
    %350 = vst.msk [vmem:[%s349] sm:$0xf] %vm205, %v347
    %351 = vst [vmem:[#allocation1] ss:$2 sm:$0xff] %v342
    %v352 = vld.sshfl [vmem:[#allocation1] sm:$0xff pattern:$0x75316420]
    %353 = vrot.lane.b32.xlu0 %v352, 32
    %v354 = vpop.permute.xlu0 %353
    %v355 = vsel %vm137, %v354, 0
    %357 = vmatpush.msra.mxu0 0.0
    %358 = vmatpush.msra.mxu0 0.0
    %359 = vmatpush.msra.mxu0 0.0
    %360 = vmatpush.msra.mxu0 0.0
    %361 = vmatpush.msra.mxu0 0.0
    %362 = vmatpush.msra.mxu0 0.0
    %363 = vmatpush.msra.mxu0 0.0
    %364 = vmatpush.msra.mxu0 0.0
    %365 = vmatpush.msra.mxu0 0.0
    %366 = vmatpush.msra.mxu0 0.0
    %367 = vmatpush.msra.mxu0 0.0
    %368 = vmatpush.msra.mxu0 0.0
    %369 = vmatpush.msra.mxu0 %v136
    %370 = vmatpush.msra.mxu0 %v135
    %371 = vmatpush.msra.mxu0 %v134
    %372 = vmatpush.msra.mxu0 %v133
    %373 = vmatmul.f32.gmra.mxu0 %v355
    %v374 = vpop.f32.mrf.mxu0
    %v375 = vadd.f32 0.0, %v374
    %376 = vdwg.mxu0
    %v377 = vadd.f32 %v126, %v375
    %v378 = vxor.u32 %v377, 2147483648
    %v379 = vmul.f32 %v378, 1.442695
    %v380 = vpow.pop %v379
    %v381 = vadd.f32 %v380, 1.0
    %v382 = vrcp.pop %v381
    %v383 = vmul.f32 %v381, %v382
    %v384 = vsub.f32 1.0, %v383
    %v385 = vmul.f32 %v382, %v384
    %v386 = vadd.f32 %v382, %v385
    %vm387 = vweird.f32 %v381
    %vm388 = vweird.f32 %v382
    %vm389 = vmor %vm387, %vm388
    %v390 = vsel %vm389, %v382, %v386
    %v391 = vand.u32 2147483647, %v381
    %vm392 = vcmp.eq.f32.partialorder %v391, 8.507059e+37
    %v393 = vand.u32 %v381, 2147483648
    %v394 = vor.u32 1.1754944e-38, %v393
    %v395 = vsel %vm392, %v394, %v390
    %v396 = vmul.f32 1.0, %v395
    %v397 = vtanh.pop %v377
    %v398 = vmul.f32 %v396, %v336
    %400 = vrot.lane.b32.xlu0 %v397, 64
    %v401 = vpop.permute.xlu0 %400
    %v403 = vmul.f32 %v396, %v401
    %405 = vrot.lane.b32.xlu0 %v403, 32
    %v406 = vpop.permute.xlu0 %405
    %v408 = vadd.f32 %v398, %v406
    %v409 = vtanh.pop %v408
    %411 = vrot.lane.b32.xlu0 %v409, 64
    %v412 = vpop.permute.xlu0 %411
    %v414 = vmul.f32 %v396, %v412
    %416 = vst [vmem:[#allocation1] ss:$2 sm:$0xff] %v414
    %v417 = vld.sshfl [vmem:[#allocation1] sm:$0xff pattern:$0x75316420]
    %418 = vrot.lane.b32.xlu0 %v417, 32
    %v419 = vpop.permute.xlu0 %418
    %s421 = scalar_lea.vmem [#allocation8], 12
    %422 = vst.msk [vmem:[%s421] sm:$0xf] %vm205, %v419
    %423 = vst [vmem:[#allocation1] ss:$2 sm:$0xff] %v414
    %v424 = vld.sshfl [vmem:[#allocation1] sm:$0xff pattern:$0x75316420]
    %425 = vrot.lane.b32.xlu0 %v424, 32
    %v426 = vpop.permute.xlu0 %425
    %v427 = vsel %vm137, %v426, 0
    %429 = vmatpush.msra.mxu0 0.0
    %430 = vmatpush.msra.mxu0 0.0
    %431 = vmatpush.msra.mxu0 0.0
    %432 = vmatpush.msra.mxu0 0.0
    %433 = vmatpush.msra.mxu0 0.0
    %434 = vmatpush.msra.mxu0 0.0
    %435 = vmatpush.msra.mxu0 0.0
    %436 = vmatpush.msra.mxu0 0.0
    %437 = vmatpush.msra.mxu0 0.0
    %438 = vmatpush.msra.mxu0 0.0
    %439 = vmatpush.msra.mxu0 0.0
    %440 = vmatpush.msra.mxu0 0.0
    %441 = vmatpush.msra.mxu0 %v136
    %442 = vmatpush.msra.mxu0 %v135
    %443 = vmatpush.msra.mxu0 %v134
    %444 = vmatpush.msra.mxu0 %v133
    %445 = vmatmul.f32.gmra.mxu0 %v427
    %v446 = vpop.f32.mrf.mxu0
    %v447 = vadd.f32 0.0, %v446
    %448 = vdwg.mxu0
    %v449 = vadd.f32 %v116, %v447
    %v450 = vxor.u32 %v449, 2147483648
    %v451 = vmul.f32 %v450, 1.442695
    %v452 = vpow.pop %v451
    %v453 = vadd.f32 %v452, 1.0
    %v454 = vrcp.pop %v453
    %v455 = vmul.f32 %v453, %v454
    %v456 = vsub.f32 1.0, %v455
    %v457 = vmul.f32 %v454, %v456
    %v458 = vadd.f32 %v454, %v457
    %vm459 = vweird.f32 %v453
    %vm460 = vweird.f32 %v454
    %vm461 = vmor %vm459, %vm460
    %v462 = vsel %vm461, %v454, %v458
    %v463 = vand.u32 2147483647, %v453
    %vm464 = vcmp.eq.f32.partialorder %v463, 8.507059e+37
    %v465 = vand.u32 %v453, 2147483648
    %v466 = vor.u32 1.1754944e-38, %v465
    %v467 = vsel %vm464, %v466, %v462
    %v468 = vmul.f32 1.0, %v467
    %v469 = vtanh.pop %v449
    %v470 = vmul.f32 %v468, %v408
    %472 = vrot.lane.b32.xlu0 %v469, 64
    %v473 = vpop.permute.xlu0 %472
    %v475 = vmul.f32 %v468, %v473
    %477 = vrot.lane.b32.xlu0 %v475, 32
    %v478 = vpop.permute.xlu0 %477
    %v480 = vadd.f32 %v470, %v478
    %v481 = vtanh.pop %v480
    %483 = vrot.lane.b32.xlu0 %v481, 64
    %v484 = vpop.permute.xlu0 %483
    %v486 = vmul.f32 %v468, %v484
    %488 = vst [vmem:[#allocation1] ss:$2 sm:$0xff] %v486
    %v489 = vld.sshfl [vmem:[#allocation1] sm:$0xff pattern:$0x75316420]
    %490 = vrot.lane.b32.xlu0 %v489, 32
    %v491 = vpop.permute.xlu0 %490
    %s493 = scalar_lea.vmem [#allocation8], 16
    %494 = vst.msk [vmem:[%s493] sm:$0xf] %vm205, %v491
    %495 = vst [vmem:[#allocation1] ss:$2 sm:$0xff] %v486
    %v496 = vld.sshfl [vmem:[#allocation1] sm:$0xff pattern:$0x75316420]
    %497 = vrot.lane.b32.xlu0 %v496, 32
    %v498 = vpop.permute.xlu0 %497
    %v499 = vsel %vm137, %v498, 0
    %501 = vmatpush.msra.mxu0 0.0
    %502 = vmatpush.msra.mxu0 0.0
    %503 = vmatpush.msra.mxu0 0.0
    %504 = vmatpush.msra.mxu0 0.0
    %505 = vmatpush.msra.mxu0 0.0
    %506 = vmatpush.msra.mxu0 0.0
    %507 = vmatpush.msra.mxu0 0.0
    %508 = vmatpush.msra.mxu0 0.0
    %509 = vmatpush.msra.mxu0 0.0
    %510 = vmatpush.msra.mxu0 0.0
    %511 = vmatpush.msra.mxu0 0.0
    %512 = vmatpush.msra.mxu0 0.0
    %513 = vmatpush.msra.mxu0 %v136
    %514 = vmatpush.msra.mxu0 %v135
    %515 = vmatpush.msra.mxu0 %v134
    %516 = vmatpush.msra.mxu0 %v133
    %517 = vmatmul.f32.gmra.mxu0 %v499
    %v518 = vpop.f32.mrf.mxu0
    %v519 = vadd.f32 0.0, %v518
    %520 = vdwg.mxu0
    %v521 = vadd.f32 %v127, %v519
    %v522 = vxor.u32 %v521, 2147483648
    %v523 = vmul.f32 %v522, 1.442695
    %v524 = vpow.pop %v523
    %v525 = vadd.f32 %v524, 1.0
    %v526 = vrcp.pop %v525
    %v527 = vmul.f32 %v525, %v526
    %v528 = vsub.f32 1.0, %v527
    %v529 = vmul.f32 %v526, %v528
    %v530 = vadd.f32 %v526, %v529
    %vm531 = vweird.f32 %v525
    %vm532 = vweird.f32 %v526
    %vm533 = vmor %vm531, %vm532
    %v534 = vsel %vm533, %v526, %v530
    %v535 = vand.u32 2147483647, %v525
    %vm536 = vcmp.eq.f32.partialorder %v535, 8.507059e+37
    %v537 = vand.u32 %v525, 2147483648
    %v538 = vor.u32 1.1754944e-38, %v537
    %v539 = vsel %vm536, %v538, %v534
    %v540 = vmul.f32 1.0, %v539
    %v541 = vtanh.pop %v521
    %v542 = vmul.f32 %v540, %v480
    %544 = vrot.lane.b32.xlu0 %v541, 64
    %v545 = vpop.permute.xlu0 %544
    %v547 = vmul.f32 %v540, %v545
    %549 = vrot.lane.b32.xlu0 %v547, 32
    %v550 = vpop.permute.xlu0 %549
    %v552 = vadd.f32 %v542, %v550
    %v553 = vtanh.pop %v552
    %555 = vrot.lane.b32.xlu0 %v553, 64
    %v556 = vpop.permute.xlu0 %555
    %v558 = vmul.f32 %v540, %v556
    %560 = vst [vmem:[#allocation1] ss:$2 sm:$0xff] %v558
    %v561 = vld.sshfl [vmem:[#allocation1] sm:$0xff pattern:$0x75316420]
    %562 = vrot.lane.b32.xlu0 %v561, 32
    %v563 = vpop.permute.xlu0 %562
    %s565 = scalar_lea.vmem [#allocation8], 20
    %566 = vst.msk [vmem:[%s565] sm:$0xf] %vm205, %v563
    %567 = vst [vmem:[#allocation1] ss:$2 sm:$0xff] %v558
    %v568 = vld.sshfl [vmem:[#allocation1] sm:$0xff pattern:$0x75316420]
    %569 = vrot.lane.b32.xlu0 %v568, 32
    %v570 = vpop.permute.xlu0 %569
    %v571 = vsel %vm137, %v570, 0
    %573 = vmatpush.msra.mxu0 0.0
    %574 = vmatpush.msra.mxu0 0.0
    %575 = vmatpush.msra.mxu0 0.0
    %576 = vmatpush.msra.mxu0 0.0
    %577 = vmatpush.msra.mxu0 0.0
    %578 = vmatpush.msra.mxu0 0.0
    %579 = vmatpush.msra.mxu0 0.0
    %580 = vmatpush.msra.mxu0 0.0
    %581 = vmatpush.msra.mxu0 0.0
    %582 = vmatpush.msra.mxu0 0.0
    %583 = vmatpush.msra.mxu0 0.0
    %584 = vmatpush.msra.mxu0 0.0
    %585 = vmatpush.msra.mxu0 %v136
    %586 = vmatpush.msra.mxu0 %v135
    %587 = vmatpush.msra.mxu0 %v134
    %588 = vmatpush.msra.mxu0 %v133
    %589 = vmatmul.f32.gmra.mxu0 %v571
    %v590 = vpop.f32.mrf.mxu0
    %v591 = vadd.f32 0.0, %v590
    %592 = vdwg.mxu0
    %v593 = vadd.f32 %v119, %v591
    %v594 = vxor.u32 %v593, 2147483648
    %v595 = vmul.f32 %v594, 1.442695
    %v596 = vpow.pop %v595
    %v597 = vadd.f32 %v596, 1.0
    %v598 = vrcp.pop %v597
    %v599 = vmul.f32 %v597, %v598
    %v600 = vsub.f32 1.0, %v599
    %v601 = vmul.f32 %v598, %v600
    %v602 = vadd.f32 %v598, %v601
    %vm603 = vweird.f32 %v597
    %vm604 = vweird.f32 %v598
    %vm605 = vmor %vm603, %vm604
    %v606 = vsel %vm605, %v598, %v602
    %v607 = vand.u32 2147483647, %v597
    %vm608 = vcmp.eq.f32.partialorder %v607, 8.507059e+37
    %v609 = vand.u32 %v597, 2147483648
    %v610 = vor.u32 1.1754944e-38, %v609
    %v611 = vsel %vm608, %v610, %v606
    %v612 = vmul.f32 1.0, %v611
    %v613 = vtanh.pop %v593
    %v614 = vmul.f32 %v612, %v552
    %616 = vrot.lane.b32.xlu0 %v613, 64
    %v617 = vpop.permute.xlu0 %616
    %v619 = vmul.f32 %v612, %v617
    %621 = vrot.lane.b32.xlu0 %v619, 32
    %v622 = vpop.permute.xlu0 %621
    %v624 = vadd.f32 %v614, %v622
    %v625 = vtanh.pop %v624
    %627 = vrot.lane.b32.xlu0 %v625, 64
    %v628 = vpop.permute.xlu0 %627
    %v630 = vmul.f32 %v612, %v628
    %632 = vst [vmem:[#allocation1] ss:$2 sm:$0xff] %v630
    %v633 = vld.sshfl [vmem:[#allocation1] sm:$0xff pattern:$0x75316420]
    %634 = vrot.lane.b32.xlu0 %v633, 32
    %v635 = vpop.permute.xlu0 %634
    %s637 = scalar_lea.vmem [#allocation8], 24
    %638 = vst.msk [vmem:[%s637] sm:$0xf] %vm205, %v635
    %639 = vst [vmem:[#allocation1] ss:$2 sm:$0xff] %v630
    %v640 = vld.sshfl [vmem:[#allocation1] sm:$0xff pattern:$0x75316420]
    %641 = vrot.lane.b32.xlu0 %v640, 32
    %v642 = vpop.permute.xlu0 %641
    %v643 = vsel %vm137, %v642, 0
    %645 = vmatpush.msra.mxu0 0.0
    %646 = vmatpush.msra.mxu0 0.0
    %647 = vmatpush.msra.mxu0 0.0
    %648 = vmatpush.msra.mxu0 0.0
    %649 = vmatpush.msra.mxu0 0.0
    %650 = vmatpush.msra.mxu0 0.0
    %651 = vmatpush.msra.mxu0 0.0
    %652 = vmatpush.msra.mxu0 0.0
    %653 = vmatpush.msra.mxu0 0.0
    %654 = vmatpush.msra.mxu0 0.0
    %655 = vmatpush.msra.mxu0 0.0
    %656 = vmatpush.msra.mxu0 0.0
    %657 = vmatpush.msra.mxu0 %v136
    %658 = vmatpush.msra.mxu0 %v135
    %659 = vmatpush.msra.mxu0 %v134
    %660 = vmatpush.msra.mxu0 %v133
    %661 = vmatmul.f32.gmra.mxu0 %v643
    %v662 = vpop.f32.mrf.mxu0
    %v663 = vadd.f32 0.0, %v662
    %664 = vdwg.mxu0
    %v665 = vadd.f32 %v128, %v663
    %v666 = vxor.u32 %v665, 2147483648
    %v667 = vmul.f32 %v666, 1.442695
    %v668 = vpow.pop %v667
    %v669 = vadd.f32 %v668, 1.0
    %v670 = vrcp.pop %v669
    %v671 = vmul.f32 %v669, %v670
    %v672 = vsub.f32 1.0, %v671
    %v673 = vmul.f32 %v670, %v672
    %v674 = vadd.f32 %v670, %v673
    %vm675 = vweird.f32 %v669
    %vm676 = vweird.f32 %v670
    %vm677 = vmor %vm675, %vm676
    %v678 = vsel %vm677, %v670, %v674
    %v679 = vand.u32 2147483647, %v669
    %vm680 = vcmp.eq.f32.partialorder %v679, 8.507059e+37
    %v681 = vand.u32 %v669, 2147483648
    %v682 = vor.u32 1.1754944e-38, %v681
    %v683 = vsel %vm680, %v682, %v678
    %v684 = vmul.f32 1.0, %v683
    %v685 = vtanh.pop %v665
    %v686 = vmul.f32 %v684, %v624
    %688 = vrot.lane.b32.xlu0 %v685, 64
    %v689 = vpop.permute.xlu0 %688
    %v691 = vmul.f32 %v684, %v689
    %693 = vrot.lane.b32.xlu0 %v691, 32
    %v694 = vpop.permute.xlu0 %693
    %v696 = vadd.f32 %v686, %v694
    %v697 = vtanh.pop %v696
    %699 = vrot.lane.b32.xlu0 %v697, 64
    %v700 = vpop.permute.xlu0 %699
    %v702 = vmul.f32 %v684, %v700
    %704 = vst [vmem:[#allocation1] ss:$2 sm:$0xff] %v702
    %v705 = vld.sshfl [vmem:[#allocation1] sm:$0xff pattern:$0x75316420]
    %706 = vrot.lane.b32.xlu0 %v705, 32
    %v707 = vpop.permute.xlu0 %706
    %s709 = scalar_lea.vmem [#allocation8], 28
    %710 = vst.msk [vmem:[%s709] sm:$0xf] %vm205, %v707
    %711 = vst [vmem:[#allocation1] ss:$2 sm:$0xff] %v702
    %v712 = vld.sshfl [vmem:[#allocation1] sm:$0xff pattern:$0x75316420]
    %713 = vrot.lane.b32.xlu0 %v712, 32
    %v714 = vpop.permute.xlu0 %713
    %716 = vst.msk [vmem:[#allocation9] sm:$0xf] %vm205, %v714
    %718 = vst [vmem:[#allocation1] ss:$2 sm:$0xff] %v696
    %v719 = vld.sshfl [vmem:[#allocation1] sm:$0xff pattern:$0x75316420]
    %720 = vrot.lane.b32.xlu0 %v719, 96
    %v721 = vpop.permute.xlu0 %720
    %723 = vst.msk [vmem:[#allocation11] sm:$0xf] %vm205, %v721
    // Predicated region
    $region30: #{rnn_readout_wrapper_forward.1} parent=1 // pred_check
      _
    $region31: #{rnn_readout_wrapper_forward.1} parent=1 // pred_check_branch
      %725 = sbr.rel (0) target = $region33
    $region32: #{rnn_readout_wrapper_forward.1} parent=1 // pred_region
      %727 = vsyncadd [#allocation4], 0
      %s728 = sshll.u32 [#allocation8], 4
      %s729 = int_to_ptr.vmem [resolvable:$true] %s728
      %s730 = sshll.u32 %s4, 4
      %s731 = int_to_ptr.hbm [resolvable:$true] %s730
      %736 = dma.vmem_to_hbm [thread:$0]  %s729, 512, %s731, [#allocation4], 64, 64, 4
    $region33: #{rnn_readout_wrapper_forward.1} parent=1 // pred_fallthru
      _
    // Predicated region
    $region34: #{rnn_readout_wrapper_forward.1} parent=1 // pred_check
      _
    $region35: #{rnn_readout_wrapper_forward.1} parent=1 // pred_check_branch
      %738 = sbr.rel (0) target = $region37
    $region36: #{rnn_readout_wrapper_forward.1} parent=1 // pred_region
      %740 = vsyncadd [#allocation10], 0
      %s742 = sshll.u32 [#allocation9], 4
      %s743 = int_to_ptr.vmem [resolvable:$true] %s742
      %s744 = sshll.u32 %s5, 4
      %s745 = int_to_ptr.hbm [resolvable:$true] %s744
      %747 = dma.vmem_to_hbm [thread:$0]  %s743, 64, %s745, [#allocation10]
    $region37: #{rnn_readout_wrapper_forward.1} parent=1 // pred_fallthru
      _
    // Predicated region
    $region38: #{rnn_readout_wrapper_forward.1} parent=1 // pred_check
      _
    $region39: #{rnn_readout_wrapper_forward.1} parent=1 // pred_check_branch
      %749 = sbr.rel (0) target = $region41
    $region40: #{rnn_readout_wrapper_forward.1} parent=1 // pred_region
      %751 = vsyncadd [#allocation10], 0
      %s753 = sshll.u32 [#allocation11], 4
      %s754 = int_to_ptr.vmem [resolvable:$true] %s753
      %s755 = sshll.u32 %s6, 4
      %s756 = int_to_ptr.hbm [resolvable:$true] %s755
      %758 = dma.vmem_to_hbm [thread:$0]  %s754, 64, %s756, [#allocation10]
    $region41: #{rnn_readout_wrapper_forward.1} parent=1 // pred_fallthru
      _
    // Predicated region
    $region42: #{rnn_readout_wrapper_forward.1} parent=1 // pred_check
      _
    $region43: #{rnn_readout_wrapper_forward.1} parent=1 // pred_check_branch
      %760 = sbr.rel (0) target = $region45
    $region44: #{rnn_readout_wrapper_forward.1} parent=1 // pred_region
      %762 = dma.done [#allocation4], 512
    $region45: #{rnn_readout_wrapper_forward.1} parent=1 // pred_fallthru
      _
    // Predicated region
    $region46: #{rnn_readout_wrapper_forward.1} parent=1 // pred_check
      _
    $region47: #{rnn_readout_wrapper_forward.1} parent=1 // pred_check_branch
      %764 = sbr.rel (0) target = $region49
    $region48: #{rnn_readout_wrapper_forward.1} parent=1 // pred_region
      %766 = dma.done [#allocation10], 64
    $region49: #{rnn_readout_wrapper_forward.1} parent=1 // pred_fallthru
      _
    // Predicated region
    $region50: #{rnn_readout_wrapper_forward.1} parent=1 // pred_check
      _
    $region51: #{rnn_readout_wrapper_forward.1} parent=1 // pred_check_branch
      %768 = sbr.rel (0) target = $region53
    $region52: #{rnn_readout_wrapper_forward.1} parent=1 // pred_region
      %770 = dma.done [#allocation10], 64
    $region53: #{rnn_readout_wrapper_forward.1} parent=1 // pred_fallthru
      _
    %771 = vsyncpa [#allocation3], 1
    %772 = vsyncpa [#allocation6], 1
    %773 = vsyncpa [#allocation4], 1
    %774 = vsyncpa [#allocation10], 1

</llo_original>
